<compile_context>
chip_gen: v6e
topology: v6e:2x2x1
jax: 0.10.0
libtpu: 0.0.40
codegen_flags: <defaults>
</compile_context>

<pallas_src>
import jax
import jax.numpy as jnp
from jax import lax
from jax.experimental import pallas as pl
from jax.experimental.pallas import tpu as pltpu


def _round_up(n, m):
    return (n + m - 1) // m * m


def _pick_hw_tile(hwp, target):
    """Largest multiple-of-128 divisor of hwp that is <= target (>=128)."""
    best = 128
    for k in range(1, hwp // 128 + 1):
        t = 128 * k
        if t > target:
            break
        if hwp % t == 0:
            best = t
    return best


# ---------------------------------------------------------------------------
# Path A: whole (c, hw) slab per batch element (small feature maps).
# ---------------------------------------------------------------------------
def _nam_single_kernel(sigma_ref, x_ref, o_ref):
    # sigma_ref: SMEM (1,) scalar-prefetch parameter
    # x_ref, o_ref: VMEM (c, hw) tiles for the current batch element (batch squeezed)
    x = x_ref[...].astype(jnp.float32)                    # (c, hw) f32
    xb = x.astype(jnp.bfloat16)                           # bf16 view for MXU

    # Gram matrix: contract the lane (spatial) dim of both operands -> no transpose copy.
    dot = lax.dot_general(xb, xb, (((1,), (1,)), ((), ())),
                          preferred_element_type=jnp.float32)        # (c, c)

    # Per-channel L2 norms (f32), denominator as a broadcast outer product (VPU),
    # division as an EUP approximate reciprocal.  Keeps the original
    # `norms @ norms.T + 1e-8` semantics (0 / 1e-8 -> 0 for zero-norm channels).
    ss = jnp.sum(x * x, axis=-1, keepdims=True)                      # (c, 1)
    norms = jnp.sqrt(ss)                                             # (c, 1)
    denom = norms * norms.T + 1e-8                                   # (c, c)
    atte = dot * pl.reciprocal(denom, approx=True)                   # (c, c)

    out = jnp.dot(atte.astype(jnp.bfloat16), xb,
                  preferred_element_type=jnp.float32)                # (c, hw)

    sigma = sigma_ref[0]
    o_ref[...] = (sigma * out + x).astype(o_ref.dtype)


def _nam_single(xf, sigma):
    b, cp, hwp = xf.shape
    grid_spec = pltpu.PrefetchScalarGridSpec(
        num_scalar_prefetch=1,                 # sigma -> SMEM before grid runs
        grid=(b,),
        in_specs=[pl.BlockSpec((None, cp, hwp), lambda i, sig: (i, 0, 0))],
        out_specs=pl.BlockSpec((None, cp, hwp), lambda i, sig: (i, 0, 0)),
    )
    cost = pl.CostEstimate(
        flops=4 * b * cp * cp * hwp,
        transcendentals=b * (cp + cp * cp),
        bytes_accessed=2 * b * cp * hwp * 4,
    )
    return pl.pallas_call(
        _nam_single_kernel,
        out_shape=jax.ShapeDtypeStruct((b, cp, hwp), xf.dtype),
        grid_spec=grid_spec,
        compiler_params=pltpu.CompilerParams(dimension_semantics=("parallel",)),
        cost_estimate=cost,
    )(sigma, xf)


# ---------------------------------------------------------------------------
# Path B: hw-tiled two-pass pipeline (large feature maps, bounded VMEM).
# ---------------------------------------------------------------------------
def _nam_gram_kernel(x_ref, dot_ref, ss_ref):
    # Accumulate gram matrix and per-channel sum-of-squares over hw tiles.
    t = pl.program_id(1)

    @pl.when(t == 0)
    def _():
        dot_ref[...] = jnp.zeros_like(dot_ref)
        ss_ref[...] = jnp.zeros_like(ss_ref)

    x = x_ref[...].astype(jnp.float32)                     # (c, t_hw)
    xb = x.astype(jnp.bfloat16)
    dot_ref[...] += lax.dot_general(xb, xb, (((1,), (1,)), ((), ())),
                                    preferred_element_type=jnp.float32)
    ss_ref[...] += jnp.sum(x * x, axis=-1, keepdims=True)


def _nam_apply_kernel(sigma_ref, dot_ref, ss_ref, x_ref, o_ref):
    dot = dot_ref[...]                                     # (c, c) f32
    norms = jnp.sqrt(ss_ref[...])                          # (c, 1)
    denom = norms * norms.T + 1e-8                         # (c, c)
    atte = dot * pl.reciprocal(denom, approx=True)

    x = x_ref[...].astype(jnp.float32)                     # (c, t_hw)
    out = jnp.dot(atte.astype(jnp.bfloat16), x.astype(jnp.bfloat16),
                  preferred_element_type=jnp.float32)

    sigma = sigma_ref[0]
    o_ref[...] = (sigma * out + x).astype(o_ref.dtype)


def _nam_tiled(xf, sigma, hw_tile):
    b, cp, hwp = xf.shape
    t_hw = _pick_hw_tile(hwp, hw_tile)
    nt = hwp // t_hw

    # Pass 1: accumulate (c, c) gram and (c, 1) sum-of-squares over hw tiles.
    gram_spec = pltpu.PrefetchScalarGridSpec(
        num_scalar_prefetch=0,
        grid=(b, nt),
        in_specs=[pl.BlockSpec((None, cp, t_hw), lambda i, t: (i, 0, t))],
        out_specs=[
            pl.BlockSpec((None, cp, cp), lambda i, t: (i, 0, 0)),
            pl.BlockSpec((None, cp, 1), lambda i, t: (i, 0, 0)),
        ],
    )
    dot, ss = pl.pallas_call(
        _nam_gram_kernel,
        out_shape=(jax.ShapeDtypeStruct((b, cp, cp), jnp.float32),
                   jax.ShapeDtypeStruct((b, cp, 1), jnp.float32)),
        grid_spec=gram_spec,
        compiler_params=pltpu.CompilerParams(
            dimension_semantics=("parallel", "arbitrary")),
        cost_estimate=pl.CostEstimate(
            flops=2 * b * cp * cp * hwp,
            transcendentals=0,
            bytes_accessed=b * cp * hwp * 4 + b * cp * cp * 4),
    )(xf)

    # Pass 2: normalize and apply attention tile-by-tile, add residual.
    apply_spec = pltpu.PrefetchScalarGridSpec(
        num_scalar_prefetch=1,
        grid=(b, nt),
        in_specs=[
            pl.BlockSpec((None, cp, cp), lambda i, t, sig: (i, 0, 0)),
            pl.BlockSpec((None, cp, 1), lambda i, t, sig: (i, 0, 0)),
            pl.BlockSpec((None, cp, t_hw), lambda i, t, sig: (i, 0, t)),
        ],
        out_specs=pl.BlockSpec((None, cp, t_hw), lambda i, t, sig: (i, 0, t)),
    )
    return pl.pallas_call(
        _nam_apply_kernel,
        out_shape=jax.ShapeDtypeStruct((b, cp, hwp), xf.dtype),
        grid_spec=apply_spec,
        compiler_params=pltpu.CompilerParams(
            dimension_semantics=("parallel", "parallel")),
        cost_estimate=pl.CostEstimate(
            flops=2 * b * cp * cp * hwp,
            transcendentals=b * nt * (cp + cp * cp),
            bytes_accessed=2 * b * cp * hwp * 4 + b * cp * cp * 4),
    )(sigma, dot, ss, xf)


# ---------------------------------------------------------------------------
# Public wrapper.
# ---------------------------------------------------------------------------
def nam_forward(x, sigma, *, hw_tile=512, force_tiled=None):
    """x: (b, c, h, w) float32, sigma: (1,) float32 -> (b, c, h, w)."""
    b, c, h, w = x.shape
    hw = h * w
    cp = _round_up(c, 8)          # sublane-align channels
    hwp = _round_up(hw, 128)      # lane-align spatial dim (VGG sizes are ragged)

    sigma = jnp.asarray(sigma, jnp.float32).reshape(1)
    xf = x.reshape(b, c, hw)
    if (cp, hwp) != (c, hw):
        # Zero padding is exact for gram / norms / out (padded rows & cols stay 0).
        xf = jnp.pad(xf, ((0, 0), (0, cp - c), (0, hwp - hw)))

    # Rough per-grid-step VMEM need for the single-slab path: double-buffered
    # in/out slabs + f32/bf16 temporaries.  Above the threshold, switch to the
    # hw-tiled two-pass pipeline so VMEM stays bounded on v7x/v5e.
    single_vmem_est = 7 * cp * hwp * 4 + 3 * cp * cp * 4
    if force_tiled is None:
        use_tiled = single_vmem_est > 12 * 1024 * 1024
    else:
        use_tiled = force_tiled

    if use_tiled:
        out = _nam_tiled(xf, sigma, hw_tile)
    else:
        out = _nam_single(xf, sigma)

    return out[:, :c, :hw].reshape(b, c, h, w)


def nam_reference(x, sigma):
    """Pure-JAX reference matching the PyTorch forward exactly (f32)."""
    b, c, h, w = x.shape
    q = x.reshape(b, c, h * w)
    dot = jnp.einsum("bcs,bds->bcd", q, q)
    n = jnp.linalg.norm(q, axis=2)                        # (b, c)
    denom = n[:, :, None] * n[:, None, :] + 1e-8
    atte = dot / denom
    out = jnp.einsum("bcd,bds->bcs", atte, q).reshape(b, c, h, w)
    return sigma[0] * out + x


if __name__ == "__main__":
    key = jax.random.PRNGKey(0)
    b, c, h, w = 2, 4, 16, 16
    x = jax.random.normal(key, (b, c, h, w), dtype=jnp.float32)

    # nn.Parameter(torch.zeros(1)) -> shape (1,). Use a nonzero value so the
    # attention path actually contributes.
    sigma = jnp.array([0.5], dtype=jnp.float32)

    y_ref = nam_reference(x, sigma)

    # Path A: single-slab-per-batch-element kernel (what this shape dispatches to).
    y1 = jax.block_until_ready(nam_forward(x, sigma, force_tiled=False))
    # Path B: hw-tiled two-pass pipeline (used automatically for VGG-scale maps);
    # exercised here with a 128-wide tile so the accumulation loop runs (nt=2).
    y2 = jax.block_until_ready(nam_forward(x, sigma, force_tiled=True, hw_tile=128))

    assert y1.shape == (b, c, h, w)
    assert y2.shape == (b, c, h, w)
    # Matmul operands are bf16 (f32 accumulation) and the divide uses the EUP
    # approximate reciprocal, so compare with a correspondingly relaxed tolerance.
    assert jnp.allclose(y1, y_ref, atol=5e-2, rtol=5e-2), "single-pass mismatch vs reference"
    assert jnp.allclose(y2, y_ref, atol=5e-2, rtol=5e-2), "tiled mismatch vs reference"

    print("KERNEL_OK")
</pallas_src>

<mosaic_0001>
module attributes {stable_mosaic.version = 11 : i64} {
  func.func @_nam_single_kernel(%arg0: i32, %arg1: memref<1xf32, #tpu.memory_space<smem>>, %arg2: memref<1x8x256xf32, #tpu.memory_space<vmem>>, %arg3: memref<1x8x256xf32, #tpu.memory_space<vmem>>) attributes {dimension_semantics = [#tpu.dimension_semantics<parallel>], iteration_bounds = array<i64: 2>, scalar_prefetch = 1 : i64, scratch_operands = 0 : i64, tpu.core_type = #tpu.core_type<tc>, window_params = [{transform_indices = @transform_0, window_bounds = array<i64: 1, 8, 256>}, {transform_indices = @transform_1, window_bounds = array<i64: 1, 8, 256>}]} {
    %c0 = arith.constant 0 : index
    %c0_0 = arith.constant 0 : index
    %c0_1 = arith.constant 0 : index
    %0 = vector.load %arg2[%c0, %c0_0, %c0_1] : memref<1x8x256xf32, #tpu.memory_space<vmem>>, vector<1x8x256xf32>
    %1 = vector.shape_cast %0 : vector<1x8x256xf32> to vector<8x256xf32>
    %2 = arith.truncf %1 : vector<8x256xf32> to vector<8x256xbf16>
    %cst = arith.constant dense<0.000000e+00> : vector<8x8xf32>
    %3 = tpu.matmul %2, %2, %cst {dimension_numbers = #tpu.dot_dimension_numbers<[1], [1], [0], [0], [0, 0, 1, 0], [], []>} : vector<8x256xbf16>, vector<8x256xbf16>, vector<8x8xf32> -> vector<8x8xf32>
    %4 = arith.mulf %1, %1 : vector<8x256xf32>
    %cst_2 = arith.constant dense<0.000000e+00> : vector<8xf32>
    %5 = vector.multi_reduction <add>, %4, %cst_2 [1] : vector<8x256xf32> to vector<8xf32>
    %6 = vector.shape_cast %5 : vector<8xf32> to vector<8x1xf32>
    %7 = math.sqrt %6 : vector<8x1xf32>
    %8 = tpu.transpose %7, [1, 0] : vector<8x1xf32> -> vector<1x8xf32>
    %9 = vector.broadcast %7 : vector<8x1xf32> to vector<8x8xf32>
    %10 = vector.broadcast %8 : vector<1x8xf32> to vector<8x8xf32>
    %11 = arith.mulf %9, %10 : vector<8x8xf32>
    %cst_3 = arith.constant 9.99999993E-9 : f32
    %12 = vector.broadcast %cst_3 : f32 to vector<8x8xf32>
    %13 = arith.addf %11, %12 : vector<8x8xf32>
    %14 = tpu.reciprocal %13 {approx = true} : vector<8x8xf32> -> vector<8x8xf32>
    %15 = arith.mulf %3, %14 : vector<8x8xf32>
    %16 = arith.truncf %15 : vector<8x8xf32> to vector<8x8xbf16>
    %cst_4 = arith.constant dense<0.000000e+00> : vector<8x256xf32>
    %17 = tpu.matmul %16, %2, %cst_4 {dimension_numbers = #tpu.dot_dimension_numbers<[1], [0], [0], [1], [0, 0, 1, 1], [], []>} : vector<8x8xbf16>, vector<8x256xbf16>, vector<8x256xf32> -> vector<8x256xf32>
    %c0_5 = arith.constant 0 : index
    %18 = memref.load %arg1[%c0_5] : memref<1xf32, #tpu.memory_space<smem>>
    %19 = vector.broadcast %18 : f32 to vector<8x256xf32>
    %20 = arith.mulf %19, %17 : vector<8x256xf32>
    %21 = arith.addf %20, %1 : vector<8x256xf32>
    %c0_6 = arith.constant 0 : index
    %c0_7 = arith.constant 0 : index
    %c0_8 = arith.constant 0 : index
    %22 = vector.load %arg3[%c0_6, %c0_7, %c0_8] : memref<1x8x256xf32, #tpu.memory_space<vmem>>, vector<1x8x256xf32>
    %23 = vector.shape_cast %22 : vector<1x8x256xf32> to vector<8x256xf32>
    %24 = vector.shape_cast %21 : vector<8x256xf32> to vector<1x8x256xf32>
    tpu.vector_store %arg3[%c0_6, %c0_7, %c0_8], %24 {strides = array<i32>} : memref<1x8x256xf32, #tpu.memory_space<vmem>>, vector<1x8x256xf32>,
    return
  }
  func.func @transform_0(%arg0: i32, %arg1: memref<1xf32, #tpu.memory_space<smem>>) -> (i32, i32, i32) {
    %c0_i32 = arith.constant 0 : i32
    %c0_i32_0 = arith.constant 0 : i32
    %c0_i32_1 = arith.constant 0 : i32
    return %arg0, %c0_i32, %c0_i32_0 : i32, i32, i32
  }
  func.func @transform_1(%arg0: i32, %arg1: memref<1xf32, #tpu.memory_space<smem>>) -> (i32, i32, i32) {
    %c0_i32 = arith.constant 0 : i32
    %c0_i32_0 = arith.constant 0 : i32
    %c0_i32_1 = arith.constant 0 : i32
    return %arg0, %c0_i32, %c0_i32_0 : i32, i32, i32
  }
}

</mosaic_0001>

<llo_original>
// kernel: tpu_custom_call.1
$region0: #{tpu_custom_call.1}
  #allocation0 [shape = 'u32[]', space=smem, size = 0x4, offset = 0x4, fixed_abs, tag = 'smem constant byte address 0x4 - core index']
  #allocation1 [shape = 'u32[144,128]{1,0:T(1,128)}', space=vmem, size = 0x12000, scoped, tag = 'internal scratch']
  #allocation2 [shape = 's32[1]{0}', space=sflag, size = 0x4, scoped, tag = 'scoped memory for tpu_custom_call.1']
  #allocation3 [shape = 'f32[1]{0:T(128)S(6)}', space=smem, size = 0x200, scoped, tag = 'prefetched SMEM operand 0']
  %s0 = inlined_call_operand.<no memory space> [shape: f32[1], index: 0, kind: input, shape index: {}]
  %s1 = inlined_call_operand.hbm [shape: f32[2,8,256], index: 1, kind: input, shape index: {}]
  %s2 = inlined_call_operand.hbm [shape: f32[2,8,256], index: 2, kind: output, shape index: {}]
  %s3 = sld [smem:[#allocation0]]
  $region41: #{tpu_custom_call.1} parent=0
    _
  %s5 = ssub.s32 1, %s3
  %s6 = scalar_select 0, %s5, %s3
  %7 = sst [smem:[#allocation3]] %s0
  $region1: #{tpu_custom_call.1} parent=0
    #allocation4 [shape = 'u8[16384]{0}', space=vmem, size = 0x4000, scoped, tag = 'input window, operand 1']
    #allocation5 [shape = 's32[2]{0}', space=sflag, size = 0x8, scoped, tag = 'scoped memory for tpu_custom_call.1']
    #allocation6 [shape = 's32[2]{0}', space=sflag, size = 0x8, scoped, tag = 'scoped memory for tpu_custom_call.1']
    #allocation7 [shape = 'u8[16384]{0}', space=vmem, size = 0x4000, scoped, tag = 'output window, operand 0']
    %8 = vsyncpa [#allocation5], 0
    %s9 = scalar_lea.sflag [#allocation5], 1
    %10 = vsyncpa %s9, 0
    %11 = vsyncpa [#allocation6], 0
    %s12 = scalar_lea.sflag [#allocation6], 1
    %13 = vsyncpa %s12, 0
    loop: start=0, step=1, limit=4
    $region2: #{tpu_custom_call.1} parent=1 // loop_pre_header
      _
    $region3: #{tpu_custom_call.1} parent=1 // loop_header
      %s15 = sphi 0, %s19
      %p16 = scmp.ge.s32.totalorder %s15, 4
      %s25 = sphi 0, %s27
      %s28 = sphi 0, %s25
      %s29 = sphi 0, %s28
      %s45 = sphi 0, %s29
      %s51 = sphi 0, %s53
      %s54 = sphi 0, %s51
      %s55 = sphi 0, %s54
      %s71 = sphi 0, %s55
    $region4: #{tpu_custom_call.1} parent=1 // loop_header_branch
      %18 = sbr.rel (%p16) target = $region8
    $region5: #{tpu_custom_call.1} parent=1 // loop_body
      %s20 = ssub.s32 %s15, 1
      %s21 = ssub.s32 %s15, 2
      %s22 = sadd.s32 %s15, 1
      %s23 = ssub.s32 %s15, %s22
      %p24 = scmp.eq.s32.totalorder %s23, 0
      %s26 = sadd.s32 %s25, 1
      %s27 = scalar_select %p24, %s25, %s26
      %p30 = pneg %p24
      %p31 = scmp.eq.s32.totalorder %s15, 1
      %p32 = por %p30, %p31
      %p33 = scmp.ne.s32.totalorder %s25, %s28
      %p34 = scmp.eq.s32.totalorder %s15, 0
      %p35 = por %p33, %p34
      %p36 = scmp.ne.s32.totalorder %s25, %s28
      %p37 = scmp.eq.s32.totalorder %s20, 1
      %p38 = por %p36, %p37
      %p39 = scmp.ne.s32.totalorder %s28, %s29
      %p40 = scmp.eq.s32.totalorder %s20, 0
      %p41 = por %p39, %p40
      %p42 = scmp.ne.s32.totalorder %s28, %s29
      %p43 = scmp.eq.s32.totalorder %s21, 1
      %p44 = por %p42, %p43
      %p46 = scmp.ne.s32.totalorder %s29, %s45
      %p47 = scmp.eq.s32.totalorder %s21, 0
      %p48 = por %p46, %p47
      %s49 = ssub.s32 %s15, %s22
      %p50 = scmp.eq.s32.totalorder %s49, 0
      %s52 = sadd.s32 %s51, 1
      %s53 = scalar_select %p50, %s51, %s52
      %p56 = pneg %p50
      %p57 = scmp.eq.s32.totalorder %s15, 1
      %p58 = por %p56, %p57
      %p59 = scmp.ne.s32.totalorder %s51, %s54
      %p60 = scmp.eq.s32.totalorder %s15, 0
      %p61 = por %p59, %p60
      %p62 = scmp.ne.s32.totalorder %s51, %s54
      %p63 = scmp.eq.s32.totalorder %s20, 1
      %p64 = por %p62, %p63
      %p65 = scmp.ne.s32.totalorder %s54, %s55
      %p66 = scmp.eq.s32.totalorder %s20, 0
      %p67 = por %p65, %p66
      %p68 = scmp.ne.s32.totalorder %s54, %s55
      %p69 = scmp.eq.s32.totalorder %s21, 1
      %p70 = por %p68, %p69
      %p72 = scmp.ne.s32.totalorder %s55, %s71
      %p73 = scmp.eq.s32.totalorder %s21, 0
      %p74 = por %p72, %p73
      %p75 = scmp.le.s32.totalorder 1, %s15
      %p76 = scmp.lt.s32.totalorder %s15, 3
      %p77 = pnand %p75, %p76
      %p78 = pneg %p77
      // Predicated region
      $region9: #{tpu_custom_call.1} parent=5 // pred_check
        _
      $region10: #{tpu_custom_call.1} parent=5 // pred_check_branch
        %80 = sbr.rel (%p77) target = $region12
      $region11: #{tpu_custom_call.1} parent=5 // pred_region
        %s81 = ssub.s32 %s15, 1
      $region12: #{tpu_custom_call.1} parent=5 // pred_fallthru
        _
      %p82 = scmp.lt.s32.totalorder %s15, 2
      // Predicated region
      $region13: #{tpu_custom_call.1} parent=5 // pred_check
        %p83 = pneg %p82
      $region14: #{tpu_custom_call.1} parent=5 // pred_check_branch
        %85 = sbr.rel (%p83) target = $region16
      $region15: #{tpu_custom_call.1} parent=5 // pred_region
        // Predicated region
        $region17: #{tpu_custom_call.1} parent=15 // pred_check
          %p86 = pneg %p35
        $region18: #{tpu_custom_call.1} parent=15 // pred_check_branch
          %88 = sbr.rel (%p86) target = $region20
        $region19: #{tpu_custom_call.1} parent=15 // pred_region
          %s89 = sand.u32 %s25, 1
          %s90 = scalar_lea.sflag [#allocation5], %s89
          %s91 = sand.u32 %s25, 1
          %s92 = smul.addr %s91, 16
          %s93 = scalar_lea.vmem [#allocation4], %s92
          %s95 = ssub.s32 256, 256
          %96 = vsyncadd %s90, %s95
          %s97 = smul.addr %s15, 2
          %s98 = smul.addr %s97, 128
          %s99 = scalar_lea.hbm %s1, %s98
          %s101 = sshll.u32 %s93, 4
          %s102 = int_to_ptr.vmem [resolvable:$true] %s101
          %104 = dma.hbm_to_vmem [thread:$0]  %s99, 256, %s102, %s90
        $region20: #{tpu_custom_call.1} parent=15 // pred_fallthru
          _
      $region16: #{tpu_custom_call.1} parent=5 // pred_fallthru
        _
      %p105 = scmp.le.s32.totalorder 1, %s15
      %p106 = scmp.lt.s32.totalorder %s15, 3
      %p107 = pnand %p105, %p106
      %p108 = pneg %p107
      // Predicated region
      $region21: #{tpu_custom_call.1} parent=5 // pred_check
        _
      $region22: #{tpu_custom_call.1} parent=5 // pred_check_branch
        %110 = sbr.rel (%p107) target = $region24
      $region23: #{tpu_custom_call.1} parent=5 // pred_region
        %s111 = ssub.s32 %s15, 1
        %s112 = sand.u32 %s28, 1
        %s113 = scalar_lea.sflag [#allocation5], %s112
        %s114 = sand.u32 %s28, 1
        %s115 = smul.addr %s114, 16
        %s116 = scalar_lea.vmem [#allocation4], %s115
        // Predicated region
        $region25: #{tpu_custom_call.1} parent=23 // pred_check
          %p117 = pneg %p41
        $region26: #{tpu_custom_call.1} parent=23 // pred_check_branch
          %119 = sbr.rel (%p117) target = $region28
        $region27: #{tpu_custom_call.1} parent=23 // pred_region
          %120 = dma.done %s113, 256
        $region28: #{tpu_custom_call.1} parent=23 // pred_fallthru
          _
        %s121 = sand.u32 %s28, 1
        %s122 = scalar_lea.sflag [#allocation5], %s121
        %s123 = sand.u32 %s28, 1
        %s124 = smul.addr %s123, 16
        %s125 = scalar_lea.vmem [#allocation4], %s124
        %p126 = pneg %p41
        %p127 = pneg %p38
        %p128 = pneg %p67
        %p129 = pneg %p64
        %s130 = sand.u32 %s54, 1
        %s131 = scalar_lea.sflag [#allocation6], %s130
        %s132 = sand.u32 %s54, 1
        %s133 = smul.addr %s132, 16
        %s134 = scalar_lea.vmem [#allocation7], %s133
        %v136 = vld [vmem:[%s116] sm:$0xff]
        %v137 = vld [vmem:[%s116 + $0x8] sm:$0xff]
        %v138 = vpack.c.bf16 %v136, %v136
        %v139 = vpack.c.bf16 %v137, %v137
        %140 = vmatprep.subr.bf16.mxu0 0
        %141 = vmatpush1.bf16.xpose.msra.mxu0 0
        %142 = vmatprep.subr.bf16.mxu0 0
        %143 = vmatpush1.bf16.xpose.msra.mxu0 0
        %144 = vmatprep.subr.bf16.mxu0 0
        %145 = vmatpush1.bf16.xpose.msra.mxu0 0
        %146 = vmatprep.subr.bf16.mxu0 0
        %147 = vmatpush1.bf16.xpose.msra.mxu0 0
        %148 = vmatprep.subr.bf16.mxu0 0
        %149 = vmatpush1.bf16.xpose.msra.mxu0 0
        %150 = vmatprep.subr.bf16.mxu0 0
        %151 = vmatpush1.bf16.xpose.msra.mxu0 0
        %152 = vmatprep.subr.bf16.mxu0 0
        %153 = vmatpush1.bf16.xpose.msra.mxu0 0
        %154 = vmatprep.subr.bf16.mxu0 %v139
        %155 = vmatpush1.bf16.xpose.msra.mxu0 %v138
        %156 = vmatprep.subr.bf16.mxu0 0
        %157 = vmatpush2.bf16.xpose.msra.mxu0 0
        %158 = vmatprep.subr.bf16.mxu0 0
        %159 = vmatpush2.bf16.xpose.msra.mxu0 0
        %160 = vmatprep.subr.bf16.mxu0 0
        %161 = vmatpush2.bf16.xpose.msra.mxu0 0
        %162 = vmatprep.subr.bf16.mxu0 0
        %163 = vmatpush2.bf16.xpose.msra.mxu0 0
        %164 = vmatprep.subr.bf16.mxu0 0
        %165 = vmatpush2.bf16.xpose.msra.mxu0 0
        %166 = vmatprep.subr.bf16.mxu0 0
        %167 = vmatpush2.bf16.xpose.msra.mxu0 0
        %168 = vmatprep.subr.bf16.mxu0 0
        %169 = vmatpush2.bf16.xpose.msra.mxu0 0
        %170 = vmatprep.subr.bf16.mxu0 0
        %171 = vmatpush2.bf16.xpose.msra.mxu0 0
        %172 = vmatprep.mubr.bf16.mxu0 %v139
        %173 = vmatmul.mubr.bf16.gmra.mxu0 %v138
        %v174 = vpop.f32.mrf.mxu0
        %v175 = vadd.f32 0.0, %v174
        %v176 = vpop.f32.mrf.mxu0
        %v177 = vpop.f32.mrf.mxu0
        %v178 = vpop.f32.mrf.mxu0
        %179 = vdwg.mxu0
        %v180 = vmul.f32 %v136, %v136
        %v181 = vmul.f32 %v137, %v137
        %v182 = vadd.f32 %v180, %v181
        %183 = vadd.xlane.f32.xlu0 %v182
        %v184 = vpop.xlane.xlu0 %183
        %v185 = vrsqrt.pop %v184
        %v186 = vmul.f32 %v184, %v185
        %vm187 = vcmp.eq.f32.partialorder %v184, inf
        %v188 = vsel %vm187, %v184, %v186
        %vm189 = vcmp.eq.f32.partialorder %v184, 0.0
        %v190 = vand.u32 %v184, 2147483648
        %v191 = vsel %vm189, %v190, %v188
        %192 = vxpose.xlu0.b32.start [1/16] %v191, 128
        %193 = vxpose.xlu0.b32.cont [2/16] 0.0, 128
        %194 = vxpose.xlu0.b32.cont [3/16] 0.0, 128
        %195 = vxpose.xlu0.b32.cont [4/16] 0.0, 128
        %196 = vxpose.xlu0.b32.cont [5/16] 0.0, 128
        %197 = vxpose.xlu0.b32.cont [6/16] 0.0, 128
        %198 = vxpose.xlu0.b32.cont [7/16] 0.0, 128
        %199 = vxpose.xlu0.b32.cont [8/16] 0.0, 128
        %200 = vxpose.xlu0.b32.cont [9/16] 0.0, 128
        %201 = vxpose.xlu0.b32.cont [10/16] 0.0, 128
        %202 = vxpose.xlu0.b32.cont [11/16] 0.0, 128
        %203 = vxpose.xlu0.b32.cont [12/16] 0.0, 128
        %204 = vxpose.xlu0.b32.cont [13/16] 0.0, 128
        %205 = vxpose.xlu0.b32.cont [14/16] 0.0, 128
        %206 = vxpose.xlu0.b32.cont [15/16] 0.0, 128
        %207 = vxpose.xlu0.b32.end [16/16] 0.0, 128
        %v208 = vpop.trf.xlu0
        %v209 = vpop.trf.xlu0
        %v210 = vpop.trf.xlu0
        %v211 = vpop.trf.xlu0
        %v212 = vpop.trf.xlu0
        %v213 = vpop.trf.xlu0
        %v214 = vpop.trf.xlu0
        %v215 = vpop.trf.xlu0
        %v216 = vpop.trf.xlu0
        %v217 = vpop.trf.xlu0
        %v218 = vpop.trf.xlu0
        %v219 = vpop.trf.xlu0
        %v220 = vpop.trf.xlu0
        %v221 = vpop.trf.xlu0
        %v222 = vpop.trf.xlu0
        %v223 = vpop.trf.xlu0
        %v224 = vlaneseq
        %v225 = vshrl.u32 %v224, 7
        %v226 = vsub.s32 0, %v225
        %v227 = vrot.slane %v208, %v226
        %v228 = vmul.f32 %v191, %v227
        %v229 = vadd.f32 %v228, 1e-08
        %v230 = vrcp.pop %v229
        %v231 = vmul.f32 %v175, %v230
        %v232 = vpack.c.bf16 %v231, %v231
        %vm233 = vcmask 64512
        %v235 = vsel %vm233, %v232, 0
        %vm237 = vcmask 1043456
        %v239 = vsel %vm237, %v138, 0
        %v242 = vsel %vm237, %v139, 0
        %244 = vmatprep.subr.bf16.mxu0 0
        %245 = vmatpush1.bf16.msra.mxu0 0
        %246 = vmatprep.subr.bf16.mxu0 0
        %247 = vmatpush1.bf16.msra.mxu0 0
        %248 = vmatprep.subr.bf16.mxu0 0
        %249 = vmatpush1.bf16.msra.mxu0 0
        %250 = vmatprep.subr.bf16.mxu0 0
        %251 = vmatpush1.bf16.msra.mxu0 0
        %252 = vmatprep.subr.bf16.mxu0 0
        %253 = vmatpush1.bf16.msra.mxu0 0
        %254 = vmatprep.subr.bf16.mxu0 0
        %255 = vmatpush1.bf16.msra.mxu0 0
        %256 = vmatprep.subr.bf16.mxu0 0
        %257 = vmatpush1.bf16.msra.mxu0 0
        %258 = vmatprep.subr.bf16.mxu0 %v242
        %259 = vmatpush1.bf16.msra.mxu0 %v239
        %260 = vmatprep.subr.bf16.mxu0 0
        %261 = vmatpush2.bf16.msra.mxu0 0
        %262 = vmatprep.subr.bf16.mxu0 0
        %263 = vmatpush2.bf16.msra.mxu0 0
        %264 = vmatprep.subr.bf16.mxu0 0
        %265 = vmatpush2.bf16.msra.mxu0 0
        %266 = vmatprep.subr.bf16.mxu0 0
        %267 = vmatpush2.bf16.msra.mxu0 0
        %268 = vmatprep.subr.bf16.mxu0 0
        %269 = vmatpush2.bf16.msra.mxu0 0
        %270 = vmatprep.subr.bf16.mxu0 0
        %271 = vmatpush2.bf16.msra.mxu0 0
        %272 = vmatprep.subr.bf16.mxu0 0
        %273 = vmatpush2.bf16.msra.mxu0 0
        %274 = vmatprep.subr.bf16.mxu0 0
        %275 = vmatpush2.bf16.msra.mxu0 0
        %276 = vmatprep.mubr.bf16.mxu0 0
        %277 = vmatmul.mubr.bf16.gmra.mxu0 %v235
        %v278 = vpop.f32.mrf.mxu0
        %v279 = vadd.f32 0.0, %v278
        %v280 = vpop.f32.mrf.mxu0
        %v281 = vadd.f32 0.0, %v280
        %v282 = vpop.f32.mrf.mxu0
        %v283 = vpop.f32.mrf.mxu0
        %284 = vdwg.mxu0
        %s285 = sld [smem:[#allocation3]]
        %v286 = vstv %s285
        %v287 = vmul.f32 %v286, %v279
        %v288 = vmul.f32 %v286, %v281
        %v289 = vadd.f32 %v287, %v136
        %v290 = vadd.f32 %v288, %v137
        %291 = vst [vmem:[%s134] sm:$0xff] %v289
        %292 = vst [vmem:[%s134 + $0x8] sm:$0xff] %v290
        %s293 = sand.u32 %s54, 1
        %s294 = scalar_lea.sflag [#allocation6], %s293
        %s295 = sand.u32 %s54, 1
        %s296 = smul.addr %s295, 16
        %s297 = scalar_lea.vmem [#allocation7], %s296
        // Predicated region
        $region29: #{tpu_custom_call.1} parent=23 // pred_check
          %p298 = pneg %p64
        $region30: #{tpu_custom_call.1} parent=23 // pred_check_branch
          %300 = sbr.rel (%p298) target = $region32
        $region31: #{tpu_custom_call.1} parent=23 // pred_region
          %s302 = ssub.s32 256, 256
          %303 = vsyncadd %s294, %s302
          %s304 = smul.addr %s20, 2
          %s305 = smul.addr %s304, 128
          %s306 = scalar_lea.hbm %s2, %s305
          %s308 = sshll.u32 %s297, 4
          %s309 = int_to_ptr.vmem [resolvable:$true] %s308
          %311 = dma.vmem_to_hbm [thread:$0]  %s309, 256, %s306, %s294
        $region32: #{tpu_custom_call.1} parent=23 // pred_fallthru
          _
      $region24: #{tpu_custom_call.1} parent=5 // pred_fallthru
        _
      %p312 = scmp.le.s32.totalorder 2, %s15
      // Predicated region
      $region33: #{tpu_custom_call.1} parent=5 // pred_check
        %p313 = pneg %p312
      $region34: #{tpu_custom_call.1} parent=5 // pred_check_branch
        %315 = sbr.rel (%p313) target = $region36
      $region35: #{tpu_custom_call.1} parent=5 // pred_region
        %s316 = ssub.s32 %s15, 2
        // Predicated region
        $region37: #{tpu_custom_call.1} parent=35 // pred_check
          %p317 = pneg %p70
        $region38: #{tpu_custom_call.1} parent=35 // pred_check_branch
          %319 = sbr.rel (%p317) target = $region40
        $region39: #{tpu_custom_call.1} parent=35 // pred_region
          %s320 = sand.u32 %s55, 1
          %s321 = scalar_lea.sflag [#allocation6], %s320
          %s322 = sand.u32 %s55, 1
          %s323 = smul.addr %s322, 16
          %s324 = scalar_lea.vmem [#allocation7], %s323
          %325 = dma.done %s321, 256
        $region40: #{tpu_custom_call.1} parent=35 // pred_fallthru
          _
      $region36: #{tpu_custom_call.1} parent=5 // pred_fallthru
        _
    $region6: #{tpu_custom_call.1} parent=1 // loop_footer
      %s19 = sadd.s32 1, %s15
    $region7: #{tpu_custom_call.1} parent=1 // loop_footer_branch
      %14 = sbr.rel target = $region3
    $region8: #{tpu_custom_call.1} parent=1 // loop_exit
      _
    %326 = vsyncpa [#allocation5], 1
    %s327 = scalar_lea.sflag [#allocation5], 1
    %328 = vsyncpa %s327, 1
    %329 = vsyncpa [#allocation6], 1
    %s330 = scalar_lea.sflag [#allocation6], 1
    %331 = vsyncpa %s330, 1

</llo_original>
